<compile_context>
chip_gen: v5e
topology: v5e:2x2
jax: 0.10.0
libtpu: 0.0.40
codegen_flags: <defaults>
</compile_context>

<pallas_src>
import jax
import jax.numpy as jnp
from jax.experimental import pallas as pl
from jax.experimental.pallas import tpu as pltpu


def _mlp_kernel(x_ref, w1_ref, b1_ref, w2_ref, b2_ref, w3_ref, b3_ref, o_ref):
    # x: (TB, 784); w1: (784, 256); w2: (256, 128); w3: (128, 128) [cols >=10 zero].
    # Matmul operands run in the weights' dtype (f32 or bf16); accumulation, biases,
    # ReLU and the output store stay f32.
    cdt = w1_ref.dtype
    x = x_ref[...].astype(cdt)
    h1 = jnp.dot(x, w1_ref[...], preferred_element_type=jnp.float32) + b1_ref[...]
    h1 = jnp.maximum(h1, 0.0).astype(cdt)
    h2 = jnp.dot(h1, w2_ref[...], preferred_element_type=jnp.float32) + b2_ref[...]
    h2 = jnp.maximum(h2, 0.0).astype(cdt)
    o_ref[...] = (
        jnp.dot(h2, w3_ref[...], preferred_element_type=jnp.float32) + b3_ref[...]
    ).astype(o_ref.dtype)


def _pick_tile(B: int) -> int:
    """Batch-tile rows.

    B <= 512: single block equal to the full batch (block dim == array dim is always
    a legal TPU block, so no padding / partial blocks).  Larger B: multiple of 16
    (bf16 sublane packing), capped at 1024 rows (fits v5e's default scoped VMEM in
    f32), and <= ceil(B/2) so there are at least two grid steps for v7x megacore.
    """
    if B <= 512:
        return B
    return int(min(1024, pl.cdiv(pl.cdiv(B, 2), 16) * 16))


@jax.jit
def simplenet_forward(x, params):
    """x: (B, 1, 28, 28) or (B, 784) float32.  Returns (B, 10) float32 logits.

    The matmul-operand dtype is taken from the weights in `params` (use
    prepare_params(...) to get a bf16-weight copy for the fast path).
    """
    w1, b1, w2, b2, w3p, b3p = params  # w3p: (128, 128) zero-padded, b3p: (1, 128)
    B = x.shape[0]
    x2d = x.reshape(B, -1).astype(jnp.float32)
    assert x2d.shape[1] == 784, x2d.shape

    TB = _pick_tile(B)
    grid = (pl.cdiv(B, TB),)  # ragged: last block (if any) is partial & masked

    in_specs = [
        pl.BlockSpec((TB, 784), lambda i: (i, 0)),    # x: streamed per batch tile
        pl.BlockSpec((784, 256), lambda i: (0, 0)),   # w1: resident
        pl.BlockSpec((1, 256), lambda i: (0, 0)),     # b1: resident
        pl.BlockSpec((256, 128), lambda i: (0, 0)),   # w2: resident
        pl.BlockSpec((1, 128), lambda i: (0, 0)),     # b2: resident
        pl.BlockSpec((128, 128), lambda i: (0, 0)),   # w3 (padded): resident
        pl.BlockSpec((1, 128), lambda i: (0, 0)),     # b3 (padded): resident
    ]
    out_specs = pl.BlockSpec((TB, 128), lambda i: (i, 0))

    w_bytes = sum(int(w.size) * w.dtype.itemsize for w in (w1, w2, w3p))
    bias_bytes = sum(int(b.size) * b.dtype.itemsize for b in (b1, b2, b3p))
    cost = pl.CostEstimate(
        flops=2 * B * (784 * 256 + 256 * 128 + 128 * 128),
        transcendentals=0,
        bytes_accessed=B * 784 * x2d.dtype.itemsize + B * 128 * 4 + w_bytes + bias_bytes,
    )

    out = pl.pallas_call(
        _mlp_kernel,
        out_shape=jax.ShapeDtypeStruct((B, 128), jnp.float32),
        grid=grid,
        in_specs=in_specs,
        out_specs=out_specs,
        compiler_params=pltpu.CompilerParams(
            dimension_semantics=("parallel",),
            vmem_limit_bytes=32 * 1024 * 1024,
        ),
        cost_estimate=cost,
    )(x2d, w1, b1, w2, b2, w3p, b3p)

    # Drop the 118 zero-padded logit columns (batch is already exact, no row slice).
    # TODO(synk): if the consumer can index [:, :10] lazily, return `out` directly to
    # avoid re-reading the (B, 128) buffer for this slice.
    return out[:, :10]


def init_params(key):
    """Deterministic init matching the PyTorch module's shapes (f32).
    Weights stored as (in, out); fc3 weight/bias zero-padded to 128 output cols."""
    k1, k2, k3, k4, k5, k6 = jax.random.split(key, 6)

    def uniform(k, shape, fan_in):
        bound = 1.0 / jnp.sqrt(jnp.float32(fan_in))
        return jax.random.uniform(k, shape, jnp.float32, -bound, bound)

    w1 = uniform(k1, (784, 256), 784)   # fc1.weight.T
    b1 = uniform(k2, (1, 256), 784)     # fc1.bias
    w2 = uniform(k3, (256, 128), 256)   # fc2.weight.T
    b2 = uniform(k4, (1, 128), 256)     # fc2.bias
    w3 = uniform(k5, (128, 10), 128)    # fc3.weight.T
    b3 = uniform(k6, (1, 10), 128)      # fc3.bias

    # Lane-dense padding of the final layer: zeros so padded logits are exactly 0.
    w3p = jnp.zeros((128, 128), jnp.float32).at[:, :10].set(w3)
    b3p = jnp.zeros((1, 128), jnp.float32).at[:, :10].set(b3)
    return (w1, b1, w2, b2, w3p, b3p)


def prepare_params(params, compute_dtype=jnp.bfloat16):
    """One-time weight cast for the fast MXU path (biases stay f32)."""
    w1, b1, w2, b2, w3p, b3p = params
    return (
        w1.astype(compute_dtype), b1,
        w2.astype(compute_dtype), b2,
        w3p.astype(compute_dtype), b3p,
    )


def _reference(x, params_f32):
    w1, b1, w2, b2, w3p, b3p = params_f32
    xr = x.reshape(x.shape[0], -1).astype(jnp.float32)
    h = jnp.maximum(xr @ w1 + b1, 0.0)
    h = jnp.maximum(h @ w2 + b2, 0.0)
    return (h @ w3p[:, :10]) + b3p[:, :10]


if __name__ == "__main__":
    key = jax.random.PRNGKey(0)
    pkey, xkey = jax.random.split(key)
    params_f32 = init_params(pkey)
    params_bf16 = prepare_params(params_f32)  # one-time cast, outside the hot path

    # Small MNIST-like batch: NCHW (2, 1, 28, 28) -> single full-batch block.
    x = jax.random.normal(xkey, (2, 1, 28, 28), dtype=jnp.float32)

    logits = simplenet_forward(x, params_bf16)
    jax.block_until_ready(logits)
    ref = _reference(x, params_f32)
    assert logits.shape == (2, 10), logits.shape
    assert jnp.allclose(logits, ref, atol=5e-2, rtol=5e-2)  # bf16-operand tolerance

    # f32-weight path: bit-tight check against the reference.
    logits_f32 = simplenet_forward(x, params_f32)
    jax.block_until_ready(logits_f32)
    assert jnp.allclose(logits_f32, ref, atol=1e-4, rtol=1e-4)

    # Ragged multi-tile batch (not a multiple of the tile size): exercises the
    # unpadded grid with a masked partial last block and >= 2 grid steps.
    xb = jax.random.normal(xkey, (1037, 1, 28, 28), dtype=jnp.float32)
    logits_b = simplenet_forward(xb, params_bf16)
    jax.block_until_ready(logits_b)
    ref_b = _reference(xb, params_f32)
    assert logits_b.shape == (1037, 10), logits_b.shape
    assert jnp.allclose(logits_b, ref_b, atol=5e-2, rtol=5e-2)

    logits_bf = simplenet_forward(xb, params_f32)
    jax.block_until_ready(logits_bf)
    assert jnp.allclose(logits_bf, ref_b, atol=1e-4, rtol=1e-4)

    print("KERNEL_OK")
</pallas_src>

<mosaic_0001>
module attributes {stable_mosaic.version = 11 : i64} {
  func.func @_mlp_kernel(%arg0: i32, %arg1: memref<2x784xf32, #tpu.memory_space<vmem>>, %arg2: memref<784x256xbf16, #tpu.memory_space<vmem>>, %arg3: memref<1x256xf32, #tpu.memory_space<vmem>>, %arg4: memref<256x128xbf16, #tpu.memory_space<vmem>>, %arg5: memref<1x128xf32, #tpu.memory_space<vmem>>, %arg6: memref<128x128xbf16, #tpu.memory_space<vmem>>, %arg7: memref<1x128xf32, #tpu.memory_space<vmem>>, %arg8: memref<2x128xf32, #tpu.memory_space<vmem>>) attributes {dimension_semantics = [#tpu.dimension_semantics<parallel>], iteration_bounds = array<i64: 1>, scalar_prefetch = 0 : i64, scratch_operands = 0 : i64, tpu.core_type = #tpu.core_type<tc>, window_params = [{transform_indices = @transform_0, window_bounds = array<i64: 2, 784>}, {pipeline_mode = #tpu.pipeline_mode<synchronous>, transform_indices = @transform_1, window_bounds = array<i64: 784, 256>}, {pipeline_mode = #tpu.pipeline_mode<synchronous>, transform_indices = @transform_2, window_bounds = array<i64: 1, 256>}, {pipeline_mode = #tpu.pipeline_mode<synchronous>, transform_indices = @transform_3, window_bounds = array<i64: 256, 128>}, {pipeline_mode = #tpu.pipeline_mode<synchronous>, transform_indices = @transform_4, window_bounds = array<i64: 1, 128>}, {pipeline_mode = #tpu.pipeline_mode<synchronous>, transform_indices = @transform_5, window_bounds = array<i64: 128, 128>}, {pipeline_mode = #tpu.pipeline_mode<synchronous>, transform_indices = @transform_6, window_bounds = array<i64: 1, 128>}, {transform_indices = @transform_7, window_bounds = array<i64: 2, 128>}]} {
    %c0 = arith.constant 0 : index
    %c0_0 = arith.constant 0 : index
    %0 = vector.load %arg1[%c0, %c0_0] : memref<2x784xf32, #tpu.memory_space<vmem>>, vector<2x784xf32>
    %1 = arith.truncf %0 : vector<2x784xf32> to vector<2x784xbf16>
    %c0_1 = arith.constant 0 : index
    %c0_2 = arith.constant 0 : index
    %2 = vector.load %arg2[%c0_1, %c0_2] : memref<784x256xbf16, #tpu.memory_space<vmem>>, vector<784x256xbf16>
    %cst = arith.constant dense<0.000000e+00> : vector<2x256xf32>
    %3 = tpu.matmul %1, %2, %cst {dimension_numbers = #tpu.dot_dimension_numbers<[1], [0], [0], [1], [0, 0, 1, 1], [], []>} : vector<2x784xbf16>, vector<784x256xbf16>, vector<2x256xf32> -> vector<2x256xf32>
    %c0_3 = arith.constant 0 : index
    %c0_4 = arith.constant 0 : index
    %4 = vector.load %arg3[%c0_3, %c0_4] : memref<1x256xf32, #tpu.memory_space<vmem>>, vector<1x256xf32>
    %5 = vector.broadcast %4 : vector<1x256xf32> to vector<2x256xf32>
    %6 = arith.addf %3, %5 : vector<2x256xf32>
    %cst_5 = arith.constant 0.000000e+00 : f32
    %7 = vector.broadcast %cst_5 : f32 to vector<2x256xf32>
    %8 = arith.maximumf %6, %7 : vector<2x256xf32>
    %9 = arith.truncf %8 : vector<2x256xf32> to vector<2x256xbf16>
    %c0_6 = arith.constant 0 : index
    %c0_7 = arith.constant 0 : index
    %10 = vector.load %arg4[%c0_6, %c0_7] : memref<256x128xbf16, #tpu.memory_space<vmem>>, vector<256x128xbf16>
    %cst_8 = arith.constant dense<0.000000e+00> : vector<2x128xf32>
    %11 = tpu.matmul %9, %10, %cst_8 {dimension_numbers = #tpu.dot_dimension_numbers<[1], [0], [0], [1], [0, 0, 1, 1], [], []>} : vector<2x256xbf16>, vector<256x128xbf16>, vector<2x128xf32> -> vector<2x128xf32>
    %c0_9 = arith.constant 0 : index
    %c0_10 = arith.constant 0 : index
    %12 = vector.load %arg5[%c0_9, %c0_10] : memref<1x128xf32, #tpu.memory_space<vmem>>, vector<1x128xf32>
    %13 = vector.broadcast %12 : vector<1x128xf32> to vector<2x128xf32>
    %14 = arith.addf %11, %13 : vector<2x128xf32>
    %cst_11 = arith.constant 0.000000e+00 : f32
    %15 = vector.broadcast %cst_11 : f32 to vector<2x128xf32>
    %16 = arith.maximumf %14, %15 : vector<2x128xf32>
    %17 = arith.truncf %16 : vector<2x128xf32> to vector<2x128xbf16>
    %c0_12 = arith.constant 0 : index
    %c0_13 = arith.constant 0 : index
    %18 = vector.load %arg6[%c0_12, %c0_13] : memref<128x128xbf16, #tpu.memory_space<vmem>>, vector<128x128xbf16>
    %cst_14 = arith.constant dense<0.000000e+00> : vector<2x128xf32>
    %19 = tpu.matmul %17, %18, %cst_14 {dimension_numbers = #tpu.dot_dimension_numbers<[1], [0], [0], [1], [0, 0, 1, 1], [], []>} : vector<2x128xbf16>, vector<128x128xbf16>, vector<2x128xf32> -> vector<2x128xf32>
    %c0_15 = arith.constant 0 : index
    %c0_16 = arith.constant 0 : index
    %20 = vector.load %arg7[%c0_15, %c0_16] : memref<1x128xf32, #tpu.memory_space<vmem>>, vector<1x128xf32>
    %21 = vector.broadcast %20 : vector<1x128xf32> to vector<2x128xf32>
    %22 = arith.addf %19, %21 : vector<2x128xf32>
    %c0_17 = arith.constant 0 : index
    %c0_18 = arith.constant 0 : index
    %23 = vector.load %arg8[%c0_17, %c0_18] : memref<2x128xf32, #tpu.memory_space<vmem>>, vector<2x128xf32>
    tpu.vector_store %arg8[%c0_17, %c0_18], %22 {strides = array<i32>} : memref<2x128xf32, #tpu.memory_space<vmem>>, vector<2x128xf32>,
    return
  }
  func.func @transform_0(%arg0: i32) -> (i32, i32) {
    %c0_i32 = arith.constant 0 : i32
    %c0_i32_0 = arith.constant 0 : i32
    return %arg0, %c0_i32 : i32, i32
  }
  func.func @transform_1(%arg0: i32) -> (i32, i32) {
    %c0_i32 = arith.constant 0 : i32
    %c0_i32_0 = arith.constant 0 : i32
    %c0_i32_1 = arith.constant 0 : i32
    return %c0_i32, %c0_i32_0 : i32, i32
  }
  func.func @transform_2(%arg0: i32) -> (i32, i32) {
    %c0_i32 = arith.constant 0 : i32
    %c0_i32_0 = arith.constant 0 : i32
    %c0_i32_1 = arith.constant 0 : i32
    return %c0_i32, %c0_i32_0 : i32, i32
  }
  func.func @transform_3(%arg0: i32) -> (i32, i32) {
    %c0_i32 = arith.constant 0 : i32
    %c0_i32_0 = arith.constant 0 : i32
    %c0_i32_1 = arith.constant 0 : i32
    return %c0_i32, %c0_i32_0 : i32, i32
  }
  func.func @transform_4(%arg0: i32) -> (i32, i32) {
    %c0_i32 = arith.constant 0 : i32
    %c0_i32_0 = arith.constant 0 : i32
    %c0_i32_1 = arith.constant 0 : i32
    return %c0_i32, %c0_i32_0 : i32, i32
  }
  func.func @transform_5(%arg0: i32) -> (i32, i32) {
    %c0_i32 = arith.constant 0 : i32
    %c0_i32_0 = arith.constant 0 : i32
    %c0_i32_1 = arith.constant 0 : i32
    return %c0_i32, %c0_i32_0 : i32, i32
  }
  func.func @transform_6(%arg0: i32) -> (i32, i32) {
    %c0_i32 = arith.constant 0 : i32
    %c0_i32_0 = arith.constant 0 : i32
    %c0_i32_1 = arith.constant 0 : i32
    return %c0_i32, %c0_i32_0 : i32, i32
  }
  func.func @transform_7(%arg0: i32) -> (i32, i32) {
    %c0_i32 = arith.constant 0 : i32
    %c0_i32_0 = arith.constant 0 : i32
    return %arg0, %c0_i32 : i32, i32
  }
}

</mosaic_0001>

<llo_original>
// kernel: simplenet_forward.1
$region0: #{simplenet_forward.1}
  #allocation0 [shape = 'u32[]', space=smem, size = 0x4, offset = 0x4, fixed_abs, tag = 'smem constant byte address 0x4 - core index']
  #allocation1 [shape = 'u32[72,128]{1,0:T(1,128)}', space=vmem, size = 0x9000, scoped, tag = 'internal scratch']
  %s0 = inlined_call_operand.vmem [shape: f32[2,784], index: 0, kind: input, shape index: {}]
  %s1 = inlined_call_operand.hbm [shape: bf16[784,256], index: 1, kind: input, shape index: {}]
  %s2 = inlined_call_operand.vmem [shape: f32[1,256], index: 2, kind: input, shape index: {}]
  %s3 = inlined_call_operand.vmem [shape: bf16[256,128], index: 3, kind: input, shape index: {}]
  %s4 = inlined_call_operand.vmem [shape: f32[1,128], index: 4, kind: input, shape index: {}]
  %s5 = inlined_call_operand.vmem [shape: bf16[128,128], index: 5, kind: input, shape index: {}]
  %s6 = inlined_call_operand.vmem [shape: f32[1,128], index: 6, kind: input, shape index: {}]
  %s7 = inlined_call_operand.hbm [shape: f32[2,128], index: 7, kind: output, shape index: {}]
  %s8 = sld [smem:[#allocation0]]
  $region42: #{simplenet_forward.1} parent=0
    _
  %s10 = ssub.s32 1, %s8
  %s11 = scalar_select 0, %s10, %s8
  $region1: #{simplenet_forward.1} parent=0
    #allocation2 [shape = 'u8[401408]{0}', space=vmem, size = 0x62000, scoped, tag = 'input window, operand 1, single buffered']
    #allocation3 [shape = 's32[1]{0}', space=sflag, size = 0x4, scoped, tag = 'scoped memory for simplenet_forward.1']
    #allocation4 [shape = 's32[1]{0}', space=sflag, size = 0x4, scoped, tag = 'scoped memory for simplenet_forward.1']
    #allocation5 [shape = 'u8[1024]{0}', space=vmem, size = 0x400, scoped, tag = 'output window, operand 0, single buffered']
    %12 = vsyncpa [#allocation3], 0
    %13 = vsyncpa [#allocation4], 0
    // Predicated region
    $region2: #{simplenet_forward.1} parent=1 // pred_check
      _
    $region3: #{simplenet_forward.1} parent=1 // pred_check_branch
      %15 = sbr.rel (0) target = $region5
    $region4: #{simplenet_forward.1} parent=1 // pred_region
      _
    $region5: #{simplenet_forward.1} parent=1 // pred_fallthru
      _
    // Predicated region
    $region6: #{simplenet_forward.1} parent=1 // pred_check
      _
    $region7: #{simplenet_forward.1} parent=1 // pred_check_branch
      %17 = sbr.rel (0) target = $region9
    $region8: #{simplenet_forward.1} parent=1 // pred_region
      %19 = vsyncadd [#allocation3], 0
      %s20 = sshll.u32 %s1, 4
      %s21 = int_to_ptr.hbm [resolvable:$true] %s20
      %s22 = sshll.u32 [#allocation2], 4
      %s23 = int_to_ptr.vmem [resolvable:$true] %s22
      %28 = dma.hbm_to_vmem [thread:$0]  %s21, 12544, %s23, [#allocation3], 128, 128, 8
    $region9: #{simplenet_forward.1} parent=1 // pred_fallthru
      _
    // Predicated region
    $region10: #{simplenet_forward.1} parent=1 // pred_check
      _
    $region11: #{simplenet_forward.1} parent=1 // pred_check_branch
      %30 = sbr.rel (0) target = $region13
    $region12: #{simplenet_forward.1} parent=1 // pred_region
      _
    $region13: #{simplenet_forward.1} parent=1 // pred_fallthru
      _
    // Predicated region
    $region14: #{simplenet_forward.1} parent=1 // pred_check
      _
    $region15: #{simplenet_forward.1} parent=1 // pred_check_branch
      %32 = sbr.rel (0) target = $region17
    $region16: #{simplenet_forward.1} parent=1 // pred_region
      _
    $region17: #{simplenet_forward.1} parent=1 // pred_fallthru
      _
    // Predicated region
    $region18: #{simplenet_forward.1} parent=1 // pred_check
      _
    $region19: #{simplenet_forward.1} parent=1 // pred_check_branch
      %34 = sbr.rel (0) target = $region21
    $region20: #{simplenet_forward.1} parent=1 // pred_region
      _
    $region21: #{simplenet_forward.1} parent=1 // pred_fallthru
      _
    // Predicated region
    $region22: #{simplenet_forward.1} parent=1 // pred_check
      _
    $region23: #{simplenet_forward.1} parent=1 // pred_check_branch
      %36 = sbr.rel (0) target = $region25
    $region24: #{simplenet_forward.1} parent=1 // pred_region
      _
    $region25: #{simplenet_forward.1} parent=1 // pred_fallthru
      _
    // Predicated region
    $region26: #{simplenet_forward.1} parent=1 // pred_check
      _
    $region27: #{simplenet_forward.1} parent=1 // pred_check_branch
      %38 = sbr.rel (0) target = $region29
    $region28: #{simplenet_forward.1} parent=1 // pred_region
      _
    $region29: #{simplenet_forward.1} parent=1 // pred_fallthru
      _
    // Predicated region
    $region30: #{simplenet_forward.1} parent=1 // pred_check
      _
    $region31: #{simplenet_forward.1} parent=1 // pred_check_branch
      %40 = sbr.rel (0) target = $region33
    $region32: #{simplenet_forward.1} parent=1 // pred_region
      %42 = dma.done [#allocation3], 12544
    $region33: #{simplenet_forward.1} parent=1 // pred_fallthru
      _
    %v44 = vld [vmem:[%s0] sm:$0xff]
    %v45 = vld [vmem:[%s0 + $0x8] sm:$0x3f]
    %48 = vst [vmem:[#allocation1] ss:$4 sm:$0xff] %v44
    %s49 = scalar_lea.vmem [#allocation1], 32
    %50 = vst [vmem:[%s49] ss:$4 sm:$0xff] %v45
    %v51 = vld.sshfl [vmem:[#allocation1] sm:$0xff pattern:$0x73625140]
    %v52 = vld.sshfl [vmem:[#allocation1 + $0x8] sm:$0xff pattern:$0x73625140]
    %v53 = vld.sshfl [vmem:[#allocation1 + $0x10] sm:$0xff pattern:$0x73625140]
    %v54 = vld.sshfl [vmem:[#allocation1 + $0x18] sm:$0xff pattern:$0x73625140]
    %v55 = vld.sshfl [vmem:[#allocation1 + $0x20] sm:$0xff pattern:$0x73625140]
    %v56 = vld.sshfl [vmem:[#allocation1 + $0x28] sm:$0xff pattern:$0x73625140]
    %v57 = vld.sshfl [vmem:[#allocation1 + $0x30] sm:$0xff pattern:$0x73625140]
    %v65 = vpack.c.bf16 %v51, %v51
    %v66 = vpack.c.bf16 %v52, %v52
    %v67 = vpack.c.bf16 %v53, %v53
    %v68 = vpack.c.bf16 %v54, %v54
    %v69 = vpack.c.bf16 %v55, %v55
    %v70 = vpack.c.bf16 %v56, %v56
    %v71 = vpack.c.bf16 %v57, %v57
    %v72 = vld [vmem:[#allocation2] sm:$0xff]
    %v73 = vld [vmem:[#allocation2 + $0x8] sm:$0xff]
    %v74 = vld [vmem:[#allocation2 + $0x10] sm:$0xff]
    %v75 = vld [vmem:[#allocation2 + $0x18] sm:$0xff]
    %v76 = vld [vmem:[#allocation2 + $0x20] sm:$0xff]
    %v77 = vld [vmem:[#allocation2 + $0x28] sm:$0xff]
    %v78 = vld [vmem:[#allocation2 + $0x30] sm:$0xff]
    %v79 = vld [vmem:[#allocation2 + $0x38] sm:$0xff]
    %v80 = vld [vmem:[#allocation2 + $0x40] sm:$0xff]
    %v81 = vld [vmem:[#allocation2 + $0x48] sm:$0xff]
    %v82 = vld [vmem:[#allocation2 + $0x50] sm:$0xff]
    %v83 = vld [vmem:[#allocation2 + $0x58] sm:$0xff]
    %v84 = vld [vmem:[#allocation2 + $0x60] sm:$0xff]
    %v85 = vld [vmem:[#allocation2 + $0x68] sm:$0xff]
    %v86 = vld [vmem:[#allocation2 + $0x70] sm:$0xff]
    %v87 = vld [vmem:[#allocation2 + $0x78] sm:$0xff]
    %v88 = vld [vmem:[#allocation2 + $0x80] sm:$0xff]
    %v89 = vld [vmem:[#allocation2 + $0x88] sm:$0xff]
    %v90 = vld [vmem:[#allocation2 + $0x90] sm:$0xff]
    %v91 = vld [vmem:[#allocation2 + $0x98] sm:$0xff]
    %v92 = vld [vmem:[#allocation2 + $0xa0] sm:$0xff]
    %v93 = vld [vmem:[#allocation2 + $0xa8] sm:$0xff]
    %v94 = vld [vmem:[#allocation2 + $0xb0] sm:$0xff]
    %v95 = vld [vmem:[#allocation2 + $0xb8] sm:$0xff]
    %v96 = vld [vmem:[#allocation2 + $0xc0] sm:$0xff]
    %v97 = vld [vmem:[#allocation2 + $0xc8] sm:$0xff]
    %v98 = vld [vmem:[#allocation2 + $0xd0] sm:$0xff]
    %v99 = vld [vmem:[#allocation2 + $0xd8] sm:$0xff]
    %v100 = vld [vmem:[#allocation2 + $0xe0] sm:$0xff]
    %v101 = vld [vmem:[#allocation2 + $0xe8] sm:$0xff]
    %v102 = vld [vmem:[#allocation2 + $0xf0] sm:$0xff]
    %v103 = vld [vmem:[#allocation2 + $0xf8] sm:$0xff]
    %v104 = vld [vmem:[#allocation2 + $0x100] sm:$0xff]
    %v105 = vld [vmem:[#allocation2 + $0x108] sm:$0xff]
    %v106 = vld [vmem:[#allocation2 + $0x110] sm:$0xff]
    %v107 = vld [vmem:[#allocation2 + $0x118] sm:$0xff]
    %v108 = vld [vmem:[#allocation2 + $0x120] sm:$0xff]
    %v109 = vld [vmem:[#allocation2 + $0x128] sm:$0xff]
    %v110 = vld [vmem:[#allocation2 + $0x130] sm:$0xff]
    %v111 = vld [vmem:[#allocation2 + $0x138] sm:$0xff]
    %v112 = vld [vmem:[#allocation2 + $0x140] sm:$0xff]
    %v113 = vld [vmem:[#allocation2 + $0x148] sm:$0xff]
    %v114 = vld [vmem:[#allocation2 + $0x150] sm:$0xff]
    %v115 = vld [vmem:[#allocation2 + $0x158] sm:$0xff]
    %v116 = vld [vmem:[#allocation2 + $0x160] sm:$0xff]
    %v117 = vld [vmem:[#allocation2 + $0x168] sm:$0xff]
    %v118 = vld [vmem:[#allocation2 + $0x170] sm:$0xff]
    %v119 = vld [vmem:[#allocation2 + $0x178] sm:$0xff]
    %v120 = vld [vmem:[#allocation2 + $0x180] sm:$0xff]
    %v121 = vld [vmem:[#allocation2 + $0x188] sm:$0xff]
    %v122 = vld [vmem:[#allocation2 + $0x190] sm:$0xff]
    %v123 = vld [vmem:[#allocation2 + $0x198] sm:$0xff]
    %v124 = vld [vmem:[#allocation2 + $0x1a0] sm:$0xff]
    %v125 = vld [vmem:[#allocation2 + $0x1a8] sm:$0xff]
    %v126 = vld [vmem:[#allocation2 + $0x1b0] sm:$0xff]
    %v127 = vld [vmem:[#allocation2 + $0x1b8] sm:$0xff]
    %v128 = vld [vmem:[#allocation2 + $0x1c0] sm:$0xff]
    %v129 = vld [vmem:[#allocation2 + $0x1c8] sm:$0xff]
    %v130 = vld [vmem:[#allocation2 + $0x1d0] sm:$0xff]
    %v131 = vld [vmem:[#allocation2 + $0x1d8] sm:$0xff]
    %v132 = vld [vmem:[#allocation2 + $0x1e0] sm:$0xff]
    %v133 = vld [vmem:[#allocation2 + $0x1e8] sm:$0xff]
    %v134 = vld [vmem:[#allocation2 + $0x1f0] sm:$0xff]
    %v135 = vld [vmem:[#allocation2 + $0x1f8] sm:$0xff]
    %v136 = vld [vmem:[#allocation2 + $0x200] sm:$0xff]
    %v137 = vld [vmem:[#allocation2 + $0x208] sm:$0xff]
    %v138 = vld [vmem:[#allocation2 + $0x210] sm:$0xff]
    %v139 = vld [vmem:[#allocation2 + $0x218] sm:$0xff]
    %v140 = vld [vmem:[#allocation2 + $0x220] sm:$0xff]
    %v141 = vld [vmem:[#allocation2 + $0x228] sm:$0xff]
    %v142 = vld [vmem:[#allocation2 + $0x230] sm:$0xff]
    %v143 = vld [vmem:[#allocation2 + $0x238] sm:$0xff]
    %v144 = vld [vmem:[#allocation2 + $0x240] sm:$0xff]
    %v145 = vld [vmem:[#allocation2 + $0x248] sm:$0xff]
    %v146 = vld [vmem:[#allocation2 + $0x250] sm:$0xff]
    %v147 = vld [vmem:[#allocation2 + $0x258] sm:$0xff]
    %v148 = vld [vmem:[#allocation2 + $0x260] sm:$0xff]
    %v149 = vld [vmem:[#allocation2 + $0x268] sm:$0xff]
    %v150 = vld [vmem:[#allocation2 + $0x270] sm:$0xff]
    %v151 = vld [vmem:[#allocation2 + $0x278] sm:$0xff]
    %v152 = vld [vmem:[#allocation2 + $0x280] sm:$0xff]
    %v153 = vld [vmem:[#allocation2 + $0x288] sm:$0xff]
    %v154 = vld [vmem:[#allocation2 + $0x290] sm:$0xff]
    %v155 = vld [vmem:[#allocation2 + $0x298] sm:$0xff]
    %v156 = vld [vmem:[#allocation2 + $0x2a0] sm:$0xff]
    %v157 = vld [vmem:[#allocation2 + $0x2a8] sm:$0xff]
    %v158 = vld [vmem:[#allocation2 + $0x2b0] sm:$0xff]
    %v159 = vld [vmem:[#allocation2 + $0x2b8] sm:$0xff]
    %v160 = vld [vmem:[#allocation2 + $0x2c0] sm:$0xff]
    %v161 = vld [vmem:[#allocation2 + $0x2c8] sm:$0xff]
    %v162 = vld [vmem:[#allocation2 + $0x2d0] sm:$0xff]
    %v163 = vld [vmem:[#allocation2 + $0x2d8] sm:$0xff]
    %v164 = vld [vmem:[#allocation2 + $0x2e0] sm:$0xff]
    %v165 = vld [vmem:[#allocation2 + $0x2e8] sm:$0xff]
    %v166 = vld [vmem:[#allocation2 + $0x2f0] sm:$0xff]
    %v167 = vld [vmem:[#allocation2 + $0x2f8] sm:$0xff]
    %v168 = vld [vmem:[#allocation2 + $0x300] sm:$0xff]
    %v169 = vld [vmem:[#allocation2 + $0x308] sm:$0xff]
    %v170 = vld [vmem:[%s2] sm:$0x3]
    %v172 = vperm.slane %v170, 0
    %v173 = vperm.slane %v170, 1
    %v274 = vunpack.c.l.b16 %v72
    %v275 = vunpack.c.h.b16 %v72
    %v276 = vunpack.c.l.b16 %v73
    %v277 = vunpack.c.h.b16 %v73
    %v278 = vunpack.c.l.b16 %v74
    %v279 = vunpack.c.h.b16 %v74
    %v280 = vunpack.c.l.b16 %v75
    %v281 = vunpack.c.h.b16 %v75
    %v282 = vunpack.c.l.b16 %v76
    %v283 = vunpack.c.h.b16 %v76
    %v284 = vunpack.c.l.b16 %v77
    %v285 = vunpack.c.h.b16 %v77
    %v286 = vunpack.c.l.b16 %v78
    %v287 = vunpack.c.h.b16 %v78
    %v288 = vunpack.c.l.b16 %v79
    %v289 = vunpack.c.h.b16 %v79
    %v290 = vunpack.c.l.b16 %v80
    %v291 = vunpack.c.h.b16 %v80
    %v292 = vunpack.c.l.b16 %v81
    %v293 = vunpack.c.h.b16 %v81
    %v294 = vunpack.c.l.b16 %v82
    %v295 = vunpack.c.h.b16 %v82
    %v296 = vunpack.c.l.b16 %v83
    %v297 = vunpack.c.h.b16 %v83
    %v298 = vunpack.c.l.b16 %v84
    %v299 = vunpack.c.h.b16 %v84
    %v300 = vunpack.c.l.b16 %v85
    %v301 = vunpack.c.h.b16 %v85
    %v302 = vunpack.c.l.b16 %v86
    %v303 = vunpack.c.h.b16 %v86
    %v304 = vunpack.c.l.b16 %v87
    %v305 = vunpack.c.h.b16 %v87
    %v306 = vunpack.c.l.b16 %v88
    %v307 = vunpack.c.h.b16 %v88
    %v308 = vunpack.c.l.b16 %v89
    %v309 = vunpack.c.h.b16 %v89
    %v310 = vunpack.c.l.b16 %v90
    %v311 = vunpack.c.h.b16 %v90
    %v312 = vunpack.c.l.b16 %v91
    %v313 = vunpack.c.h.b16 %v91
    %v314 = vunpack.c.l.b16 %v92
    %v315 = vunpack.c.h.b16 %v92
    %v316 = vunpack.c.l.b16 %v93
    %v317 = vunpack.c.h.b16 %v93
    %v318 = vunpack.c.l.b16 %v94
    %v319 = vunpack.c.h.b16 %v94
    %v320 = vunpack.c.l.b16 %v95
    %v321 = vunpack.c.h.b16 %v95
    %v322 = vunpack.c.l.b16 %v96
    %v323 = vunpack.c.h.b16 %v96
    %v324 = vunpack.c.l.b16 %v97
    %v325 = vunpack.c.h.b16 %v97
    %v326 = vunpack.c.l.b16 %v98
    %v327 = vunpack.c.h.b16 %v98
    %v328 = vunpack.c.l.b16 %v99
    %v329 = vunpack.c.h.b16 %v99
    %v330 = vunpack.c.l.b16 %v100
    %v331 = vunpack.c.h.b16 %v100
    %v332 = vunpack.c.l.b16 %v101
    %v333 = vunpack.c.h.b16 %v101
    %v334 = vunpack.c.l.b16 %v102
    %v335 = vunpack.c.h.b16 %v102
    %v336 = vunpack.c.l.b16 %v103
    %v337 = vunpack.c.h.b16 %v103
    %v338 = vunpack.c.l.b16 %v104
    %v339 = vunpack.c.h.b16 %v104
    %v340 = vunpack.c.l.b16 %v105
    %v341 = vunpack.c.h.b16 %v105
    %v342 = vunpack.c.l.b16 %v106
    %v343 = vunpack.c.h.b16 %v106
    %v344 = vunpack.c.l.b16 %v107
    %v345 = vunpack.c.h.b16 %v107
    %v346 = vunpack.c.l.b16 %v108
    %v347 = vunpack.c.h.b16 %v108
    %v348 = vunpack.c.l.b16 %v109
    %v349 = vunpack.c.h.b16 %v109
    %v350 = vunpack.c.l.b16 %v110
    %v351 = vunpack.c.h.b16 %v110
    %v352 = vunpack.c.l.b16 %v111
    %v353 = vunpack.c.h.b16 %v111
    %v354 = vunpack.c.l.b16 %v112
    %v355 = vunpack.c.h.b16 %v112
    %v356 = vunpack.c.l.b16 %v113
    %v357 = vunpack.c.h.b16 %v113
    %v358 = vunpack.c.l.b16 %v114
    %v359 = vunpack.c.h.b16 %v114
    %v360 = vunpack.c.l.b16 %v115
    %v361 = vunpack.c.h.b16 %v115
    %v362 = vunpack.c.l.b16 %v116
    %v363 = vunpack.c.h.b16 %v116
    %v364 = vunpack.c.l.b16 %v117
    %v365 = vunpack.c.h.b16 %v117
    %v366 = vunpack.c.l.b16 %v118
    %v367 = vunpack.c.h.b16 %v118
    %v368 = vunpack.c.l.b16 %v119
    %v369 = vunpack.c.h.b16 %v119
    %v370 = vunpack.c.l.b16 %v120
    %v371 = vunpack.c.h.b16 %v120
    %v372 = vunpack.c.l.b16 %v121
    %v373 = vunpack.c.h.b16 %v121
    %v374 = vunpack.c.l.b16 %v122
    %v375 = vunpack.c.h.b16 %v122
    %v376 = vunpack.c.l.b16 %v123
    %v377 = vunpack.c.h.b16 %v123
    %v378 = vunpack.c.l.b16 %v124
    %v379 = vunpack.c.h.b16 %v124
    %v380 = vunpack.c.l.b16 %v125
    %v381 = vunpack.c.h.b16 %v125
    %v382 = vunpack.c.l.b16 %v126
    %v383 = vunpack.c.h.b16 %v126
    %v384 = vunpack.c.l.b16 %v127
    %v385 = vunpack.c.h.b16 %v127
    %v386 = vunpack.c.l.b16 %v128
    %v387 = vunpack.c.h.b16 %v128
    %v388 = vunpack.c.l.b16 %v129
    %v389 = vunpack.c.h.b16 %v129
    %v390 = vunpack.c.l.b16 %v130
    %v391 = vunpack.c.h.b16 %v130
    %v392 = vunpack.c.l.b16 %v131
    %v393 = vunpack.c.h.b16 %v131
    %v394 = vunpack.c.l.b16 %v132
    %v395 = vunpack.c.h.b16 %v132
    %v396 = vunpack.c.l.b16 %v133
    %v397 = vunpack.c.h.b16 %v133
    %v398 = vunpack.c.l.b16 %v134
    %v399 = vunpack.c.h.b16 %v134
    %v400 = vunpack.c.l.b16 %v135
    %v401 = vunpack.c.h.b16 %v135
    %v402 = vunpack.c.l.b16 %v136
    %v403 = vunpack.c.h.b16 %v136
    %v404 = vunpack.c.l.b16 %v137
    %v405 = vunpack.c.h.b16 %v137
    %v406 = vunpack.c.l.b16 %v138
    %v407 = vunpack.c.h.b16 %v138
    %v408 = vunpack.c.l.b16 %v139
    %v409 = vunpack.c.h.b16 %v139
    %v410 = vunpack.c.l.b16 %v140
    %v411 = vunpack.c.h.b16 %v140
    %v412 = vunpack.c.l.b16 %v141
    %v413 = vunpack.c.h.b16 %v141
    %v414 = vunpack.c.l.b16 %v142
    %v415 = vunpack.c.h.b16 %v142
    %v416 = vunpack.c.l.b16 %v143
    %v417 = vunpack.c.h.b16 %v143
    %v418 = vunpack.c.l.b16 %v144
    %v419 = vunpack.c.h.b16 %v144
    %v420 = vunpack.c.l.b16 %v145
    %v421 = vunpack.c.h.b16 %v145
    %v422 = vunpack.c.l.b16 %v146
    %v423 = vunpack.c.h.b16 %v146
    %v424 = vunpack.c.l.b16 %v147
    %v425 = vunpack.c.h.b16 %v147
    %v426 = vunpack.c.l.b16 %v148
    %v427 = vunpack.c.h.b16 %v148
    %v428 = vunpack.c.l.b16 %v149
    %v429 = vunpack.c.h.b16 %v149
    %v430 = vunpack.c.l.b16 %v150
    %v431 = vunpack.c.h.b16 %v150
    %v432 = vunpack.c.l.b16 %v151
    %v433 = vunpack.c.h.b16 %v151
    %v434 = vunpack.c.l.b16 %v152
    %v435 = vunpack.c.h.b16 %v152
    %v436 = vunpack.c.l.b16 %v153
    %v437 = vunpack.c.h.b16 %v153
    %v438 = vunpack.c.l.b16 %v154
    %v439 = vunpack.c.h.b16 %v154
    %v440 = vunpack.c.l.b16 %v155
    %v441 = vunpack.c.h.b16 %v155
    %v442 = vunpack.c.l.b16 %v156
    %v443 = vunpack.c.h.b16 %v156
    %v444 = vunpack.c.l.b16 %v157
    %v445 = vunpack.c.h.b16 %v157
    %v446 = vunpack.c.l.b16 %v158
    %v447 = vunpack.c.h.b16 %v158
    %v448 = vunpack.c.l.b16 %v159
    %v449 = vunpack.c.h.b16 %v159
    %v450 = vunpack.c.l.b16 %v160
    %v451 = vunpack.c.h.b16 %v160
    %v452 = vunpack.c.l.b16 %v161
    %v453 = vunpack.c.h.b16 %v161
    %v454 = vunpack.c.l.b16 %v162
    %v455 = vunpack.c.h.b16 %v162
    %v456 = vunpack.c.l.b16 %v163
    %v457 = vunpack.c.h.b16 %v163
    %v458 = vunpack.c.l.b16 %v164
    %v459 = vunpack.c.h.b16 %v164
    %v460 = vunpack.c.l.b16 %v165
    %v461 = vunpack.c.h.b16 %v165
    %v462 = vunpack.c.l.b16 %v166
    %v463 = vunpack.c.h.b16 %v166
    %v464 = vunpack.c.l.b16 %v167
    %v465 = vunpack.c.h.b16 %v167
    %v466 = vunpack.c.l.b16 %v168
    %v467 = vunpack.c.h.b16 %v168
    %v468 = vunpack.c.l.b16 %v169
    %v469 = vunpack.c.h.b16 %v169
    %v470 = vpack.c.b16 %v276, %v274
    %v471 = vpack.c.b16 %v277, %v275
    %v472 = vpack.c.b16 %v280, %v278
    %v473 = vpack.c.b16 %v281, %v279
    %v474 = vpack.c.b16 %v284, %v282
    %v475 = vpack.c.b16 %v285, %v283
    %v476 = vpack.c.b16 %v288, %v286
    %v477 = vpack.c.b16 %v289, %v287
    %v478 = vpack.c.b16 %v292, %v290
    %v479 = vpack.c.b16 %v293, %v291
    %v480 = vpack.c.b16 %v296, %v294
    %v481 = vpack.c.b16 %v297, %v295
    %v482 = vpack.c.b16 %v300, %v298
    %v483 = vpack.c.b16 %v301, %v299
    %v484 = vpack.c.b16 %v304, %v302
    %v485 = vpack.c.b16 %v305, %v303
    %v486 = vpack.c.b16 %v308, %v306
    %v487 = vpack.c.b16 %v309, %v307
    %v488 = vpack.c.b16 %v312, %v310
    %v489 = vpack.c.b16 %v313, %v311
    %v490 = vpack.c.b16 %v316, %v314
    %v491 = vpack.c.b16 %v317, %v315
    %v492 = vpack.c.b16 %v320, %v318
    %v493 = vpack.c.b16 %v321, %v319
    %v494 = vpack.c.b16 %v324, %v322
    %v495 = vpack.c.b16 %v325, %v323
    %v496 = vpack.c.b16 %v328, %v326
    %v497 = vpack.c.b16 %v329, %v327
    %v498 = vpack.c.b16 %v332, %v330
    %v499 = vpack.c.b16 %v333, %v331
    %v500 = vpack.c.b16 %v336, %v334
    %v501 = vpack.c.b16 %v337, %v335
    %v502 = vpack.c.b16 %v340, %v338
    %v503 = vpack.c.b16 %v341, %v339
    %v504 = vpack.c.b16 %v344, %v342
    %v505 = vpack.c.b16 %v345, %v343
    %v506 = vpack.c.b16 %v348, %v346
    %v507 = vpack.c.b16 %v349, %v347
    %v508 = vpack.c.b16 %v352, %v350
    %v509 = vpack.c.b16 %v353, %v351
    %v510 = vpack.c.b16 %v356, %v354
    %v511 = vpack.c.b16 %v357, %v355
    %v512 = vpack.c.b16 %v360, %v358
    %v513 = vpack.c.b16 %v361, %v359
    %v514 = vpack.c.b16 %v364, %v362
    %v515 = vpack.c.b16 %v365, %v363
    %v516 = vpack.c.b16 %v368, %v366
    %v517 = vpack.c.b16 %v369, %v367
    %v518 = vpack.c.b16 %v372, %v370
    %v519 = vpack.c.b16 %v373, %v371
    %v520 = vpack.c.b16 %v376, %v374
    %v521 = vpack.c.b16 %v377, %v375
    %v522 = vpack.c.b16 %v380, %v378
    %v523 = vpack.c.b16 %v381, %v379
    %v524 = vpack.c.b16 %v384, %v382
    %v525 = vpack.c.b16 %v385, %v383
    %v526 = vpack.c.b16 %v388, %v386
    %v527 = vpack.c.b16 %v389, %v387
    %v528 = vpack.c.b16 %v392, %v390
    %v529 = vpack.c.b16 %v393, %v391
    %v530 = vpack.c.b16 %v396, %v394
    %v531 = vpack.c.b16 %v397, %v395
    %v532 = vpack.c.b16 %v400, %v398
    %v533 = vpack.c.b16 %v401, %v399
    %v534 = vpack.c.b16 %v404, %v402
    %v535 = vpack.c.b16 %v405, %v403
    %v536 = vpack.c.b16 %v408, %v406
    %v537 = vpack.c.b16 %v409, %v407
    %v538 = vpack.c.b16 %v412, %v410
    %v539 = vpack.c.b16 %v413, %v411
    %v540 = vpack.c.b16 %v416, %v414
    %v541 = vpack.c.b16 %v417, %v415
    %v542 = vpack.c.b16 %v420, %v418
    %v543 = vpack.c.b16 %v421, %v419
    %v544 = vpack.c.b16 %v424, %v422
    %v545 = vpack.c.b16 %v425, %v423
    %v546 = vpack.c.b16 %v428, %v426
    %v547 = vpack.c.b16 %v429, %v427
    %v548 = vpack.c.b16 %v432, %v430
    %v549 = vpack.c.b16 %v433, %v431
    %v550 = vpack.c.b16 %v436, %v434
    %v551 = vpack.c.b16 %v437, %v435
    %v552 = vpack.c.b16 %v440, %v438
    %v553 = vpack.c.b16 %v441, %v439
    %v554 = vpack.c.b16 %v444, %v442
    %v555 = vpack.c.b16 %v445, %v443
    %v556 = vpack.c.b16 %v448, %v446
    %v557 = vpack.c.b16 %v449, %v447
    %v558 = vpack.c.b16 %v452, %v450
    %v559 = vpack.c.b16 %v453, %v451
    %v560 = vpack.c.b16 %v456, %v454
    %v561 = vpack.c.b16 %v457, %v455
    %v562 = vpack.c.b16 %v460, %v458
    %v563 = vpack.c.b16 %v461, %v459
    %v564 = vpack.c.b16 %v464, %v462
    %v565 = vpack.c.b16 %v465, %v463
    %v566 = vpack.c.b16 %v468, %v466
    %v567 = vpack.c.b16 %v469, %v467
    %vm666 = vcmask 130048
    %v668 = vsel %vm666, %v71, 0
    %670 = vmatpush.bf16.msra.mxu0 %v484
    %671 = vmatpush.bf16.msra.mxu0 %v482
    %672 = vmatpush.bf16.msra.mxu0 %v480
    %673 = vmatpush.bf16.msra.mxu0 %v478
    %674 = vmatpush.bf16.msra.mxu0 %v476
    %675 = vmatpush.bf16.msra.mxu0 %v474
    %676 = vmatpush.bf16.msra.mxu0 %v472
    %677 = vmatpush.bf16.msra.mxu0 %v470
    %678 = vmatmul.bf16.gmra.mxu0 %v65
    %v679 = vpop.f32.mrf.mxu0
    %v680 = vadd.f32 %v172, %v679
    %v681 = vpop.f32.mrf.mxu0
    %682 = vdwg.mxu0
    %683 = vmatpush.bf16.msra.mxu0 %v500
    %684 = vmatpush.bf16.msra.mxu0 %v498
    %685 = vmatpush.bf16.msra.mxu0 %v496
    %686 = vmatpush.bf16.msra.mxu0 %v494
    %687 = vmatpush.bf16.msra.mxu0 %v492
    %688 = vmatpush.bf16.msra.mxu0 %v490
    %689 = vmatpush.bf16.msra.mxu0 %v488
    %690 = vmatpush.bf16.msra.mxu0 %v486
    %691 = vmatmul.bf16.gmra.mxu0 %v66
    %v692 = vpop.f32.mrf.mxu0
    %v693 = vadd.f32 %v680, %v692
    %v694 = vpop.f32.mrf.mxu0
    %695 = vdwg.mxu0
    %696 = vmatpush.bf16.msra.mxu0 %v516
    %697 = vmatpush.bf16.msra.mxu0 %v514
    %698 = vmatpush.bf16.msra.mxu0 %v512
    %699 = vmatpush.bf16.msra.mxu0 %v510
    %700 = vmatpush.bf16.msra.mxu0 %v508
    %701 = vmatpush.bf16.msra.mxu0 %v506
    %702 = vmatpush.bf16.msra.mxu0 %v504
    %703 = vmatpush.bf16.msra.mxu0 %v502
    %704 = vmatmul.bf16.gmra.mxu0 %v67
    %v705 = vpop.f32.mrf.mxu0
    %v706 = vadd.f32 %v693, %v705
    %v707 = vpop.f32.mrf.mxu0
    %708 = vdwg.mxu0
    %709 = vmatpush.bf16.msra.mxu0 %v532
    %710 = vmatpush.bf16.msra.mxu0 %v530
    %711 = vmatpush.bf16.msra.mxu0 %v528
    %712 = vmatpush.bf16.msra.mxu0 %v526
    %713 = vmatpush.bf16.msra.mxu0 %v524
    %714 = vmatpush.bf16.msra.mxu0 %v522
    %715 = vmatpush.bf16.msra.mxu0 %v520
    %716 = vmatpush.bf16.msra.mxu0 %v518
    %717 = vmatmul.bf16.gmra.mxu0 %v68
    %v718 = vpop.f32.mrf.mxu0
    %v719 = vadd.f32 %v706, %v718
    %v720 = vpop.f32.mrf.mxu0
    %721 = vdwg.mxu0
    %722 = vmatpush.bf16.msra.mxu0 %v548
    %723 = vmatpush.bf16.msra.mxu0 %v546
    %724 = vmatpush.bf16.msra.mxu0 %v544
    %725 = vmatpush.bf16.msra.mxu0 %v542
    %726 = vmatpush.bf16.msra.mxu0 %v540
    %727 = vmatpush.bf16.msra.mxu0 %v538
    %728 = vmatpush.bf16.msra.mxu0 %v536
    %729 = vmatpush.bf16.msra.mxu0 %v534
    %730 = vmatmul.bf16.gmra.mxu0 %v69
    %v731 = vpop.f32.mrf.mxu0
    %v732 = vadd.f32 %v719, %v731
    %v733 = vpop.f32.mrf.mxu0
    %734 = vdwg.mxu0
    %735 = vmatpush.bf16.msra.mxu0 %v564
    %736 = vmatpush.bf16.msra.mxu0 %v562
    %737 = vmatpush.bf16.msra.mxu0 %v560
    %738 = vmatpush.bf16.msra.mxu0 %v558
    %739 = vmatpush.bf16.msra.mxu0 %v556
    %740 = vmatpush.bf16.msra.mxu0 %v554
    %741 = vmatpush.bf16.msra.mxu0 %v552
    %742 = vmatpush.bf16.msra.mxu0 %v550
    %743 = vmatmul.bf16.gmra.mxu0 %v70
    %v744 = vpop.f32.mrf.mxu0
    %v745 = vadd.f32 %v732, %v744
    %v746 = vpop.f32.mrf.mxu0
    %747 = vdwg.mxu0
    %748 = vmatpush.bf16.msra.mxu0 0
    %749 = vmatpush.bf16.msra.mxu0 0
    %750 = vmatpush.bf16.msra.mxu0 0
    %751 = vmatpush.bf16.msra.mxu0 0
    %752 = vmatpush.bf16.msra.mxu0 0
    %753 = vmatpush.bf16.msra.mxu0 0
    %754 = vmatpush.bf16.msra.mxu0 0
    %755 = vmatpush.bf16.msra.mxu0 %v566
    %756 = vmatmul.bf16.gmra.mxu0 %v668
    %v757 = vpop.f32.mrf.mxu0
    %v758 = vadd.f32 %v745, %v757
    %v759 = vpop.f32.mrf.mxu0
    %760 = vdwg.mxu0
    %761 = vmatpush.bf16.msra.mxu0 %v485
    %762 = vmatpush.bf16.msra.mxu0 %v483
    %763 = vmatpush.bf16.msra.mxu0 %v481
    %764 = vmatpush.bf16.msra.mxu0 %v479
    %765 = vmatpush.bf16.msra.mxu0 %v477
    %766 = vmatpush.bf16.msra.mxu0 %v475
    %767 = vmatpush.bf16.msra.mxu0 %v473
    %768 = vmatpush.bf16.msra.mxu0 %v471
    %769 = vmatmul.bf16.gmra.mxu0 %v65
    %v770 = vpop.f32.mrf.mxu0
    %v771 = vadd.f32 %v173, %v770
    %v772 = vpop.f32.mrf.mxu0
    %773 = vdwg.mxu0
    %774 = vmatpush.bf16.msra.mxu0 %v501
    %775 = vmatpush.bf16.msra.mxu0 %v499
    %776 = vmatpush.bf16.msra.mxu0 %v497
    %777 = vmatpush.bf16.msra.mxu0 %v495
    %778 = vmatpush.bf16.msra.mxu0 %v493
    %779 = vmatpush.bf16.msra.mxu0 %v491
    %780 = vmatpush.bf16.msra.mxu0 %v489
    %781 = vmatpush.bf16.msra.mxu0 %v487
    %782 = vmatmul.bf16.gmra.mxu0 %v66
    %v783 = vpop.f32.mrf.mxu0
    %v784 = vadd.f32 %v771, %v783
    %v785 = vpop.f32.mrf.mxu0
    %786 = vdwg.mxu0
    %787 = vmatpush.bf16.msra.mxu0 %v517
    %788 = vmatpush.bf16.msra.mxu0 %v515
    %789 = vmatpush.bf16.msra.mxu0 %v513
    %790 = vmatpush.bf16.msra.mxu0 %v511
    %791 = vmatpush.bf16.msra.mxu0 %v509
    %792 = vmatpush.bf16.msra.mxu0 %v507
    %793 = vmatpush.bf16.msra.mxu0 %v505
    %794 = vmatpush.bf16.msra.mxu0 %v503
    %795 = vmatmul.bf16.gmra.mxu0 %v67
    %v796 = vpop.f32.mrf.mxu0
    %v797 = vadd.f32 %v784, %v796
    %v798 = vpop.f32.mrf.mxu0
    %799 = vdwg.mxu0
    %800 = vmatpush.bf16.msra.mxu0 %v533
    %801 = vmatpush.bf16.msra.mxu0 %v531
    %802 = vmatpush.bf16.msra.mxu0 %v529
    %803 = vmatpush.bf16.msra.mxu0 %v527
    %804 = vmatpush.bf16.msra.mxu0 %v525
    %805 = vmatpush.bf16.msra.mxu0 %v523
    %806 = vmatpush.bf16.msra.mxu0 %v521
    %807 = vmatpush.bf16.msra.mxu0 %v519
    %808 = vmatmul.bf16.gmra.mxu0 %v68
    %v809 = vpop.f32.mrf.mxu0
    %v810 = vadd.f32 %v797, %v809
    %v811 = vpop.f32.mrf.mxu0
    %812 = vdwg.mxu0
    %813 = vmatpush.bf16.msra.mxu0 %v549
    %814 = vmatpush.bf16.msra.mxu0 %v547
    %815 = vmatpush.bf16.msra.mxu0 %v545
    %816 = vmatpush.bf16.msra.mxu0 %v543
    %817 = vmatpush.bf16.msra.mxu0 %v541
    %818 = vmatpush.bf16.msra.mxu0 %v539
    %819 = vmatpush.bf16.msra.mxu0 %v537
    %820 = vmatpush.bf16.msra.mxu0 %v535
    %821 = vmatmul.bf16.gmra.mxu0 %v69
    %v822 = vpop.f32.mrf.mxu0
    %v823 = vadd.f32 %v810, %v822
    %v824 = vpop.f32.mrf.mxu0
    %825 = vdwg.mxu0
    %826 = vmatpush.bf16.msra.mxu0 %v565
    %827 = vmatpush.bf16.msra.mxu0 %v563
    %828 = vmatpush.bf16.msra.mxu0 %v561
    %829 = vmatpush.bf16.msra.mxu0 %v559
    %830 = vmatpush.bf16.msra.mxu0 %v557
    %831 = vmatpush.bf16.msra.mxu0 %v555
    %832 = vmatpush.bf16.msra.mxu0 %v553
    %833 = vmatpush.bf16.msra.mxu0 %v551
    %834 = vmatmul.bf16.gmra.mxu0 %v70
    %v835 = vpop.f32.mrf.mxu0
    %v836 = vadd.f32 %v823, %v835
    %v837 = vpop.f32.mrf.mxu0
    %838 = vdwg.mxu0
    %839 = vmatpush.bf16.msra.mxu0 0
    %840 = vmatpush.bf16.msra.mxu0 0
    %841 = vmatpush.bf16.msra.mxu0 0
    %842 = vmatpush.bf16.msra.mxu0 0
    %843 = vmatpush.bf16.msra.mxu0 0
    %844 = vmatpush.bf16.msra.mxu0 0
    %845 = vmatpush.bf16.msra.mxu0 0
    %846 = vmatpush.bf16.msra.mxu0 %v567
    %847 = vmatmul.bf16.gmra.mxu0 %v668
    %v848 = vpop.f32.mrf.mxu0
    %v849 = vadd.f32 %v836, %v848
    %v850 = vpop.f32.mrf.mxu0
    %851 = vdwg.mxu0
    %v852 = vmax.f32 %v758, 0.0
    %v853 = vmax.f32 %v849, 0.0
    %v854 = vpack.c.bf16 %v852, %v852
    %v855 = vpack.c.bf16 %v853, %v853
    %v856 = vld [vmem:[%s3] sm:$0xf]
    %v857 = vld [vmem:[%s3 + $0x4] sm:$0xf]
    %v858 = vld [vmem:[%s3 + $0x8] sm:$0xf]
    %v859 = vld [vmem:[%s3 + $0xc] sm:$0xf]
    %v860 = vld [vmem:[%s3 + $0x10] sm:$0xf]
    %v861 = vld [vmem:[%s3 + $0x14] sm:$0xf]
    %v862 = vld [vmem:[%s3 + $0x18] sm:$0xf]
    %v863 = vld [vmem:[%s3 + $0x1c] sm:$0xf]
    %v864 = vld [vmem:[%s3 + $0x20] sm:$0xf]
    %v865 = vld [vmem:[%s3 + $0x24] sm:$0xf]
    %v866 = vld [vmem:[%s3 + $0x28] sm:$0xf]
    %v867 = vld [vmem:[%s3 + $0x2c] sm:$0xf]
    %v868 = vld [vmem:[%s3 + $0x30] sm:$0xf]
    %v869 = vld [vmem:[%s3 + $0x34] sm:$0xf]
    %v870 = vld [vmem:[%s3 + $0x38] sm:$0xf]
    %v871 = vld [vmem:[%s3 + $0x3c] sm:$0xf]
    %v872 = vld [vmem:[%s3 + $0x40] sm:$0xf]
    %v873 = vld [vmem:[%s3 + $0x44] sm:$0xf]
    %v874 = vld [vmem:[%s3 + $0x48] sm:$0xf]
    %v875 = vld [vmem:[%s3 + $0x4c] sm:$0xf]
    %v876 = vld [vmem:[%s3 + $0x50] sm:$0xf]
    %v877 = vld [vmem:[%s3 + $0x54] sm:$0xf]
    %v878 = vld [vmem:[%s3 + $0x58] sm:$0xf]
    %v879 = vld [vmem:[%s3 + $0x5c] sm:$0xf]
    %v880 = vld [vmem:[%s3 + $0x60] sm:$0xf]
    %v881 = vld [vmem:[%s3 + $0x64] sm:$0xf]
    %v882 = vld [vmem:[%s3 + $0x68] sm:$0xf]
    %v883 = vld [vmem:[%s3 + $0x6c] sm:$0xf]
    %v884 = vld [vmem:[%s3 + $0x70] sm:$0xf]
    %v885 = vld [vmem:[%s3 + $0x74] sm:$0xf]
    %v886 = vld [vmem:[%s3 + $0x78] sm:$0xf]
    %v887 = vld [vmem:[%s3 + $0x7c] sm:$0xf]
    %v888 = vld [vmem:[%s4] sm:$0x1]
    %v890 = vperm.slane %v888, 0
    %v924 = vunpack.c.l.b16 %v856
    %v925 = vunpack.c.l.b16 %v857
    %v926 = vunpack.c.l.b16 %v858
    %v927 = vunpack.c.l.b16 %v859
    %v928 = vunpack.c.l.b16 %v860
    %v929 = vunpack.c.l.b16 %v861
    %v930 = vunpack.c.l.b16 %v862
    %v931 = vunpack.c.l.b16 %v863
    %v932 = vunpack.c.l.b16 %v864
    %v933 = vunpack.c.l.b16 %v865
    %v934 = vunpack.c.l.b16 %v866
    %v935 = vunpack.c.l.b16 %v867
    %v936 = vunpack.c.l.b16 %v868
    %v937 = vunpack.c.l.b16 %v869
    %v938 = vunpack.c.l.b16 %v870
    %v939 = vunpack.c.l.b16 %v871
    %v940 = vunpack.c.l.b16 %v872
    %v941 = vunpack.c.l.b16 %v873
    %v942 = vunpack.c.l.b16 %v874
    %v943 = vunpack.c.l.b16 %v875
    %v944 = vunpack.c.l.b16 %v876
    %v945 = vunpack.c.l.b16 %v877
    %v946 = vunpack.c.l.b16 %v878
    %v947 = vunpack.c.l.b16 %v879
    %v948 = vunpack.c.l.b16 %v880
    %v949 = vunpack.c.l.b16 %v881
    %v950 = vunpack.c.l.b16 %v882
    %v951 = vunpack.c.l.b16 %v883
    %v952 = vunpack.c.l.b16 %v884
    %v953 = vunpack.c.l.b16 %v885
    %v954 = vunpack.c.l.b16 %v886
    %v955 = vunpack.c.l.b16 %v887
    %v956 = vpack.c.b16 %v925, %v924
    %v957 = vpack.c.b16 %v927, %v926
    %v958 = vpack.c.b16 %v929, %v928
    %v959 = vpack.c.b16 %v931, %v930
    %v960 = vpack.c.b16 %v933, %v932
    %v961 = vpack.c.b16 %v935, %v934
    %v962 = vpack.c.b16 %v937, %v936
    %v963 = vpack.c.b16 %v939, %v938
    %v964 = vpack.c.b16 %v941, %v940
    %v965 = vpack.c.b16 %v943, %v942
    %v966 = vpack.c.b16 %v945, %v944
    %v967 = vpack.c.b16 %v947, %v946
    %v968 = vpack.c.b16 %v949, %v948
    %v969 = vpack.c.b16 %v951, %v950
    %v970 = vpack.c.b16 %v953, %v952
    %v971 = vpack.c.b16 %v955, %v954
    %988 = vmatpush.bf16.msra.mxu0 %v963
    %989 = vmatpush.bf16.msra.mxu0 %v962
    %990 = vmatpush.bf16.msra.mxu0 %v961
    %991 = vmatpush.bf16.msra.mxu0 %v960
    %992 = vmatpush.bf16.msra.mxu0 %v959
    %993 = vmatpush.bf16.msra.mxu0 %v958
    %994 = vmatpush.bf16.msra.mxu0 %v957
    %995 = vmatpush.bf16.msra.mxu0 %v956
    %996 = vmatmul.bf16.gmra.mxu0 %v854
    %v997 = vpop.f32.mrf.mxu0
    %v998 = vadd.f32 %v890, %v997
    %v999 = vpop.f32.mrf.mxu0
    %1000 = vdwg.mxu0
    %1001 = vmatpush.bf16.msra.mxu0 %v971
    %1002 = vmatpush.bf16.msra.mxu0 %v970
    %1003 = vmatpush.bf16.msra.mxu0 %v969
    %1004 = vmatpush.bf16.msra.mxu0 %v968
    %1005 = vmatpush.bf16.msra.mxu0 %v967
    %1006 = vmatpush.bf16.msra.mxu0 %v966
    %1007 = vmatpush.bf16.msra.mxu0 %v965
    %1008 = vmatpush.bf16.msra.mxu0 %v964
    %1009 = vmatmul.bf16.gmra.mxu0 %v855
    %v1010 = vpop.f32.mrf.mxu0
    %v1011 = vadd.f32 %v998, %v1010
    %v1012 = vpop.f32.mrf.mxu0
    %1013 = vdwg.mxu0
    %v1014 = vmax.f32 %v1011, 0.0
    %v1015 = vpack.c.bf16 %v1014, %v1014
    %v1016 = vld [vmem:[%s5] sm:$0xf]
    %v1017 = vld [vmem:[%s5 + $0x4] sm:$0xf]
    %v1018 = vld [vmem:[%s5 + $0x8] sm:$0xf]
    %v1019 = vld [vmem:[%s5 + $0xc] sm:$0xf]
    %v1020 = vld [vmem:[%s5 + $0x10] sm:$0xf]
    %v1021 = vld [vmem:[%s5 + $0x14] sm:$0xf]
    %v1022 = vld [vmem:[%s5 + $0x18] sm:$0xf]
    %v1023 = vld [vmem:[%s5 + $0x1c] sm:$0xf]
    %v1024 = vld [vmem:[%s5 + $0x20] sm:$0xf]
    %v1025 = vld [vmem:[%s5 + $0x24] sm:$0xf]
    %v1026 = vld [vmem:[%s5 + $0x28] sm:$0xf]
    %v1027 = vld [vmem:[%s5 + $0x2c] sm:$0xf]
    %v1028 = vld [vmem:[%s5 + $0x30] sm:$0xf]
    %v1029 = vld [vmem:[%s5 + $0x34] sm:$0xf]
    %v1030 = vld [vmem:[%s5 + $0x38] sm:$0xf]
    %v1031 = vld [vmem:[%s5 + $0x3c] sm:$0xf]
    %v1032 = vld [vmem:[%s6] sm:$0x1]
    %v1034 = vperm.slane %v1032, 0
    %v1052 = vunpack.c.l.b16 %v1016
    %v1053 = vunpack.c.l.b16 %v1017
    %v1054 = vunpack.c.l.b16 %v1018
    %v1055 = vunpack.c.l.b16 %v1019
    %v1056 = vunpack.c.l.b16 %v1020
    %v1057 = vunpack.c.l.b16 %v1021
    %v1058 = vunpack.c.l.b16 %v1022
    %v1059 = vunpack.c.l.b16 %v1023
    %v1060 = vunpack.c.l.b16 %v1024
    %v1061 = vunpack.c.l.b16 %v1025
    %v1062 = vunpack.c.l.b16 %v1026
    %v1063 = vunpack.c.l.b16 %v1027
    %v1064 = vunpack.c.l.b16 %v1028
    %v1065 = vunpack.c.l.b16 %v1029
    %v1066 = vunpack.c.l.b16 %v1030
    %v1067 = vunpack.c.l.b16 %v1031
    %v1068 = vpack.c.b16 %v1053, %v1052
    %v1069 = vpack.c.b16 %v1055, %v1054
    %v1070 = vpack.c.b16 %v1057, %v1056
    %v1071 = vpack.c.b16 %v1059, %v1058
    %v1072 = vpack.c.b16 %v1061, %v1060
    %v1073 = vpack.c.b16 %v1063, %v1062
    %v1074 = vpack.c.b16 %v1065, %v1064
    %v1075 = vpack.c.b16 %v1067, %v1066
    %1084 = vmatpush.bf16.msra.mxu0 %v1075
    %1085 = vmatpush.bf16.msra.mxu0 %v1074
    %1086 = vmatpush.bf16.msra.mxu0 %v1073
    %1087 = vmatpush.bf16.msra.mxu0 %v1072
    %1088 = vmatpush.bf16.msra.mxu0 %v1071
    %1089 = vmatpush.bf16.msra.mxu0 %v1070
    %1090 = vmatpush.bf16.msra.mxu0 %v1069
    %1091 = vmatpush.bf16.msra.mxu0 %v1068
    %1092 = vmatmul.bf16.gmra.mxu0 %v1015
    %v1093 = vpop.f32.mrf.mxu0
    %v1094 = vadd.f32 %v1034, %v1093
    %v1095 = vpop.f32.mrf.mxu0
    %1096 = vdwg.mxu0
    %1097 = vst [vmem:[#allocation5] sm:$0x3] %v1094
    // Predicated region
    $region34: #{simplenet_forward.1} parent=1 // pred_check
      _
    $region35: #{simplenet_forward.1} parent=1 // pred_check_branch
      %1099 = sbr.rel (0) target = $region37
    $region36: #{simplenet_forward.1} parent=1 // pred_region
      %1101 = vsyncadd [#allocation4], 0
      %s1103 = sshll.u32 [#allocation5], 4
      %s1104 = int_to_ptr.vmem [resolvable:$true] %s1103
      %s1105 = sshll.u32 %s7, 4
      %s1106 = int_to_ptr.hbm [resolvable:$true] %s1105
      %1108 = dma.vmem_to_hbm [thread:$0]  %s1104, 32, %s1106, [#allocation4]
    $region37: #{simplenet_forward.1} parent=1 // pred_fallthru
      _
    // Predicated region
    $region38: #{simplenet_forward.1} parent=1 // pred_check
      _
    $region39: #{simplenet_forward.1} parent=1 // pred_check_branch
      %1110 = sbr.rel (0) target = $region41
    $region40: #{simplenet_forward.1} parent=1 // pred_region
      %1112 = dma.done [#allocation4], 32
    $region41: #{simplenet_forward.1} parent=1 // pred_fallthru
      _
    %1113 = vsyncpa [#allocation3], 1
    %1114 = vsyncpa [#allocation4], 1

</llo_original>
